<compile_context>
chip_gen: v5e
topology: v5e:2x2
jax: 0.10.0
libtpu: 0.0.40
codegen_flags: <defaults>
</compile_context>

<pallas_src>
import functools
import math

import jax
import jax.numpy as jnp
from jax.experimental import pallas as pl
from jax.experimental.pallas import tpu as pltpu


_SUPPORTED_ACTS = ("relu", "softplus", "linear")


def _conv3x3_matmul_kernel(x_ref, w_ref, b_ref, o_ref, *, act_type):
    """One (batch n, HW-tile m) grid step.

    x_ref : (K_pad, HW_TILE)  im2col'd columns for image n, bf16 (VMEM)
    w_ref : (C_OUT, K_pad)    folded 3x3 weights, bf16 (VMEM)
    b_ref : (C_OUT, 1)        bias, f32 (VMEM)
    o_ref : (C_OUT, HW_TILE)  output tile, f32 (VMEM), lane-dense
    """
    acc = jnp.dot(w_ref[...], x_ref[...], preferred_element_type=jnp.float32)
    acc = acc + b_ref[...]                      # (C_OUT, 1) broadcast on lanes
    if act_type == "relu":
        acc = jnp.maximum(acc, 0.0)
    elif act_type == "softplus":
        acc = jax.nn.softplus(acc)
    # act_type == "linear": identity.
    o_ref[...] = acc.astype(o_ref.dtype)


def _round_up(x, m):
    return ((x + m - 1) // m) * m


def _pick_hw_tile(n, k_pad, c_out, hw, *, vmem_budget_bytes=36 << 20):
    """Largest lane-dense HW tile fitting a double-buffered VMEM budget."""
    hw_round = _round_up(hw, 128)
    # Per grid step: 2x bf16 input block + 2x f32 output block (double
    # buffered) + resident weight/bias (tiny, also counted double-buffered).
    fixed = 2 * (k_pad * c_out * 2) + 2 * (c_out * 4)
    per_lane = 2 * (k_pad * 2) + 2 * (c_out * 4)
    max_tile = max((vmem_budget_bytes - fixed) // per_lane, 128)
    hw_tile = max(min(hw_round, (max_tile // 128) * 128), 128)
    # v7x has 2 TensorCores: aim for >= 4 total grid steps so BlockSpec
    # double-buffering can hide the input DMA on each core -- but never drop
    # below 512-lane matmul pushes (small problems stay fused: on single-TC
    # v5e/v6e the split only costs per-step overhead).
    while n * math.ceil(hw_round / hw_tile) < 4 and hw_tile >= 1024:
        hw_tile //= 2
    return hw_tile


def quantizable_conv2d_3x3(x_nchw, weight_oihw, bias, act_type="relu",
                           matmul_dtype=jnp.bfloat16):
    """QuantizableConv2d3x3.forward: Conv2d(Cin, Cout, 3, 1, 1) + activation.

    x_nchw      : (N, C_IN, H, W)     float32
    weight_oihw : (C_OUT, C_IN, 3, 3) float32  (PyTorch conv weight layout)
    bias        : (C_OUT,)            float32
    returns     : (N, C_OUT, H, W)    float32
    """
    if act_type not in _SUPPORTED_ACTS:
        # TODO(synk): 'prelu' / 'rrelu' (learned / stochastic negative slope)
        # are not wired here; raise rather than silently running linear.
        raise NotImplementedError(f"act_type={act_type!r} is not supported")

    N, C_IN, H, W = x_nchw.shape
    C_OUT = weight_oihw.shape[0]
    HW = H * W
    K = 9 * C_IN
    K_pad = _round_up(K, 16)          # bf16 sublane packing; K=36 -> 48

    hw_tile = _pick_hw_tile(N, K_pad, C_OUT, HW)
    HW_pad = _round_up(HW, hw_tile)   # lane-dense tiles, sliced off after

    # ---- glue (plain JAX, fusable by XLA): pad + im2col, NO transposes -----
    x_pad = jnp.pad(x_nchw, ((0, 0), (0, 0), (1, 1), (1, 1)))  # (N,Cin,H+2,W+2)
    taps = [x_pad[:, :, kh:kh + H, kw:kw + W]                  # 9 x (N,Cin,H,W)
            for kh in range(3) for kw in range(3)]
    patches = jnp.stack(taps, axis=1)                          # (N,9,Cin,H,W)
    x_cols = patches.reshape(N, K, HW).astype(matmul_dtype)    # (N, K, HW)
    if K_pad != K or HW_pad != HW:
        x_cols = jnp.pad(x_cols, ((0, 0), (0, K_pad - K), (0, HW_pad - HW)))

    # OIHW -> (Cout, kh, kw, Cin) -> (Cout, K); same K ordering as x_cols.
    w_fold = jnp.transpose(weight_oihw, (0, 2, 3, 1)).reshape(C_OUT, K)
    w_fold = w_fold.astype(matmul_dtype)
    if K_pad != K:
        w_fold = jnp.pad(w_fold, ((0, 0), (0, K_pad - K)))
    b_col = bias.reshape(C_OUT, 1).astype(jnp.float32)

    grid = (N, HW_pad // hw_tile)
    kernel = functools.partial(_conv3x3_matmul_kernel, act_type=act_type)

    # TODO(synk): add an 'arbitrary' innermost K grid axis + f32 VMEM
    # accumulator with pl.when init/finalize once 9*C_IN grows (C_IN >~ 128)
    # so the full-K strip no longer has to be VMEM-resident per step.
    out = pl.pallas_call(
        kernel,
        out_shape=jax.ShapeDtypeStruct((N, C_OUT, HW_pad), x_nchw.dtype),
        grid_spec=pltpu.PrefetchScalarGridSpec(
            num_scalar_prefetch=0,
            grid=grid,
            in_specs=[
                pl.BlockSpec((pl.Squeezed(), K_pad, hw_tile),
                             lambda n, m: (n, 0, m)),
                pl.BlockSpec((C_OUT, K_pad), lambda n, m: (0, 0)),
                pl.BlockSpec((C_OUT, 1), lambda n, m: (0, 0)),
            ],
            out_specs=pl.BlockSpec((pl.Squeezed(), C_OUT, hw_tile),
                                   lambda n, m: (n, 0, m)),
        ),
        compiler_params=pltpu.CompilerParams(
            dimension_semantics=("parallel", "parallel"),
            # Let XLA fuse the pad/im2col producer into the x_cols operand so
            # the 9x-duplicated patch tensor is not materialized in HBM.
            allow_input_fusion=[True, False, False],
            vmem_limit_bytes=48 << 20,
        ),
    )(x_cols, w_fold, b_col)

    if HW_pad != HW:
        out = out[:, :, :HW]
    # (N, Cout, H*W) -> (N, Cout, H, W): a reshape only, no transpose pass.
    return out.reshape(N, C_OUT, H, W)


def _reference(x_nchw, weight_oihw, bias, act_type="relu",
               matmul_dtype=jnp.float32):
    """Pure-JAX reference (torch.nn.Conv2d(in, out, 3, 1, 1) + activation)."""
    out = jax.lax.conv_general_dilated(
        x_nchw.astype(matmul_dtype), weight_oihw.astype(matmul_dtype),
        window_strides=(1, 1), padding=((1, 1), (1, 1)),
        dimension_numbers=("NCHW", "OIHW", "NCHW"),
        preferred_element_type=jnp.float32)
    out = out + bias.reshape(1, -1, 1, 1).astype(jnp.float32)
    if act_type == "relu":
        out = jnp.maximum(out, 0.0)
    elif act_type == "softplus":
        out = jax.nn.softplus(out)
    return out.astype(x_nchw.dtype)


if __name__ == "__main__":
    # Module config: in_ft=4, out_ft=8, act_type='relu' (default).
    N, C_IN, C_OUT, H, W = 2, 4, 8, 16, 16

    key = jax.random.PRNGKey(0)
    kx, kw, kb = jax.random.split(key, 3)

    x = jax.random.normal(kx, (N, C_IN, H, W), dtype=jnp.float32)

    # Deterministic parameter init mimicking nn.Conv2d defaults:
    # U(-bound, bound) with bound = 1/sqrt(fan_in), fan_in = C_IN * 3 * 3.
    fan_in = C_IN * 3 * 3
    bound = 1.0 / math.sqrt(fan_in)
    weight = jax.random.uniform(kw, (C_OUT, C_IN, 3, 3),
                                minval=-bound, maxval=bound, dtype=jnp.float32)
    bias = jax.random.uniform(kb, (C_OUT,),
                              minval=-bound, maxval=bound, dtype=jnp.float32)

    out = quantizable_conv2d_3x3(x, weight, bias, act_type="relu")
    out = jax.block_until_ready(out)
    assert out.shape == (N, C_OUT, H, W)

    # Same-precision reference (bf16 operands, f32 accumulation): tight check.
    ref_bf16 = _reference(x, weight, bias, act_type="relu",
                          matmul_dtype=jnp.bfloat16)
    err_bf16 = float(jnp.max(jnp.abs(out - ref_bf16)))
    assert jnp.allclose(out, ref_bf16, atol=1e-3, rtol=1e-3), err_bf16

    # True f32 reference: loose check covering the bf16 operand cast.
    ref_f32 = _reference(x, weight, bias, act_type="relu",
                         matmul_dtype=jnp.float32)
    err_f32 = float(jnp.max(jnp.abs(out - ref_f32)))
    assert jnp.allclose(out, ref_f32, atol=5e-2, rtol=5e-2), err_f32

    print("KERNEL_OK")
</pallas_src>

<mosaic_0001>
module attributes {stable_mosaic.version = 11 : i64} {
  func.func @_conv3x3_matmul_kernel(%arg0: i32, %arg1: i32, %arg2: memref<1x48x256xbf16, #tpu.memory_space<vmem>>, %arg3: memref<8x48xbf16, #tpu.memory_space<vmem>>, %arg4: memref<8x1xf32, #tpu.memory_space<vmem>>, %arg5: memref<1x8x256xf32, #tpu.memory_space<vmem>>) attributes {dimension_semantics = [#tpu.dimension_semantics<parallel>, #tpu.dimension_semantics<parallel>], iteration_bounds = array<i64: 2, 1>, scalar_prefetch = 0 : i64, scratch_operands = 0 : i64, tpu.core_type = #tpu.core_type<tc>, window_params = [{transform_indices = @transform_0, window_bounds = array<i64: 1, 48, 256>}, {pipeline_mode = #tpu.pipeline_mode<synchronous>, transform_indices = @transform_1, window_bounds = array<i64: 8, 48>}, {pipeline_mode = #tpu.pipeline_mode<synchronous>, transform_indices = @transform_2, window_bounds = array<i64: 8, 1>}, {transform_indices = @transform_3, window_bounds = array<i64: 1, 8, 256>}]} {
    %c0 = arith.constant 0 : index
    %c0_0 = arith.constant 0 : index
    %0 = vector.load %arg3[%c0, %c0_0] : memref<8x48xbf16, #tpu.memory_space<vmem>>, vector<8x48xbf16>
    %c0_1 = arith.constant 0 : index
    %c0_2 = arith.constant 0 : index
    %c0_3 = arith.constant 0 : index
    %1 = vector.load %arg2[%c0_1, %c0_2, %c0_3] : memref<1x48x256xbf16, #tpu.memory_space<vmem>>, vector<1x48x256xbf16>
    %2 = vector.shape_cast %1 : vector<1x48x256xbf16> to vector<48x256xbf16>
    %cst = arith.constant dense<0.000000e+00> : vector<8x256xf32>
    %3 = tpu.matmul %0, %2, %cst {dimension_numbers = #tpu.dot_dimension_numbers<[1], [0], [0], [1], [0, 0, 1, 1], [], []>} : vector<8x48xbf16>, vector<48x256xbf16>, vector<8x256xf32> -> vector<8x256xf32>
    %c0_4 = arith.constant 0 : index
    %c0_5 = arith.constant 0 : index
    %4 = vector.load %arg4[%c0_4, %c0_5] : memref<8x1xf32, #tpu.memory_space<vmem>>, vector<8x1xf32>
    %5 = vector.broadcast %4 : vector<8x1xf32> to vector<8x256xf32>
    %6 = arith.addf %3, %5 : vector<8x256xf32>
    %cst_6 = arith.constant 0.000000e+00 : f32
    %7 = vector.broadcast %cst_6 : f32 to vector<8x256xf32>
    %8 = arith.maximumf %6, %7 : vector<8x256xf32>
    %c0_7 = arith.constant 0 : index
    %c0_8 = arith.constant 0 : index
    %c0_9 = arith.constant 0 : index
    %9 = vector.load %arg5[%c0_7, %c0_8, %c0_9] : memref<1x8x256xf32, #tpu.memory_space<vmem>>, vector<1x8x256xf32>
    %10 = vector.shape_cast %9 : vector<1x8x256xf32> to vector<8x256xf32>
    %11 = vector.shape_cast %8 : vector<8x256xf32> to vector<1x8x256xf32>
    tpu.vector_store %arg5[%c0_7, %c0_8, %c0_9], %11 {strides = array<i32>} : memref<1x8x256xf32, #tpu.memory_space<vmem>>, vector<1x8x256xf32>,
    return
  }
  func.func @transform_0(%arg0: i32, %arg1: i32) -> (i32, i32, i32) {
    %c0_i32 = arith.constant 0 : i32
    %c0_i32_0 = arith.constant 0 : i32
    return %arg0, %c0_i32, %arg1 : i32, i32, i32
  }
  func.func @transform_1(%arg0: i32, %arg1: i32) -> (i32, i32) {
    %c0_i32 = arith.constant 0 : i32
    %c0_i32_0 = arith.constant 0 : i32
    %c0_i32_1 = arith.constant 0 : i32
    return %c0_i32, %c0_i32_0 : i32, i32
  }
  func.func @transform_2(%arg0: i32, %arg1: i32) -> (i32, i32) {
    %c0_i32 = arith.constant 0 : i32
    %c0_i32_0 = arith.constant 0 : i32
    %c0_i32_1 = arith.constant 0 : i32
    return %c0_i32, %c0_i32_0 : i32, i32
  }
  func.func @transform_3(%arg0: i32, %arg1: i32) -> (i32, i32, i32) {
    %c0_i32 = arith.constant 0 : i32
    %c0_i32_0 = arith.constant 0 : i32
    return %arg0, %c0_i32, %arg1 : i32, i32, i32
  }
}

</mosaic_0001>

<llo_original>
// kernel: tpu_custom_call.1
$region0: #{tpu_custom_call.1}
  #allocation0 [shape = 'u32[]', space=smem, size = 0x4, offset = 0x4, fixed_abs, tag = 'smem constant byte address 0x4 - core index']
  #allocation1 [shape = 'u32[72,128]{1,0:T(1,128)}', space=vmem, size = 0x9000, scoped, tag = 'internal scratch']
  %s0 = inlined_call_operand.hbm [shape: bf16[2,48,256], index: 0, kind: input, shape index: {}]
  %s1 = inlined_call_operand.vmem [shape: bf16[8,48], index: 1, kind: input, shape index: {}]
  %s2 = inlined_call_operand.vmem [shape: f32[8,1], index: 2, kind: input, shape index: {}]
  %s3 = inlined_call_operand.hbm [shape: f32[2,8,256], index: 3, kind: output, shape index: {}]
  %s4 = sld [smem:[#allocation0]]
  $region49: #{tpu_custom_call.1} parent=0
    _
  %s6 = ssub.s32 1, %s4
  %s7 = scalar_select 0, %s6, %s4
  $region1: #{tpu_custom_call.1} parent=0
    #allocation2 [shape = 'u8[49152]{0}', space=vmem, size = 0xc000, scoped, tag = 'input window, operand 0']
    #allocation3 [shape = 's32[2]{0}', space=sflag, size = 0x8, scoped, tag = 'scoped memory for tpu_custom_call.1']
    #allocation4 [shape = 's32[2]{0}', space=sflag, size = 0x8, scoped, tag = 'scoped memory for tpu_custom_call.1']
    #allocation5 [shape = 'u8[16384]{0}', space=vmem, size = 0x4000, scoped, tag = 'output window, operand 0']
    %8 = vsyncpa [#allocation3], 0
    %s9 = scalar_lea.sflag [#allocation3], 1
    %10 = vsyncpa %s9, 0
    %11 = vsyncpa [#allocation4], 0
    %s12 = scalar_lea.sflag [#allocation4], 1
    %13 = vsyncpa %s12, 0
    loop: start=0, step=1, limit=4
    $region2: #{tpu_custom_call.1} parent=1 // loop_pre_header
      _
    $region3: #{tpu_custom_call.1} parent=1 // loop_header
      %s15 = sphi 0, %s19
      %p16 = scmp.ge.s32.totalorder %s15, 4
      %s22 = sphi 0, %s34
      %s23 = sphi 0, %s30
      %s24 = sphi 0, %s22
      %s25 = sphi 0, %s23
      %s26 = sphi 0, %s24
      %s27 = sphi 0, %s25
      %s39 = sphi 0, %s41
      %s42 = sphi 0, %s39
      %s43 = sphi 0, %s42
      %s59 = sphi 0, %s43
      %s63 = sphi 0, %s63
      %s65 = sphi 0, %s63
      %s66 = sphi 0, %s65
      %s80 = sphi 0, %s66
      %s84 = sphi 0, %s84
      %s86 = sphi 0, %s84
      %s87 = sphi 0, %s86
      %s101 = sphi 0, %s87
      %s109 = sphi 0, %s111
      %s112 = sphi 0, %s109
      %s113 = sphi 0, %s112
      %s129 = sphi 0, %s113
    $region4: #{tpu_custom_call.1} parent=1 // loop_header_branch
      %18 = sbr.rel (%p16) target = $region8
    $region5: #{tpu_custom_call.1} parent=1 // loop_body
      %s20 = ssub.s32 %s15, 1
      %s21 = ssub.s32 %s15, 2
      %s28 = sadd.s32 1, %s23
      %p29 = scmp.ge.s32.totalorder %s28, 1
      %s30 = scalar_select %p29, 0, %s28
      %s31 = sadd.s32 1, %s22
      %s32 = scalar_select %p29, %s31, %s22
      %p33 = scmp.ge.s32.totalorder %s32, 2
      %s34 = scalar_select %p33, 0, %s32
      %s35 = ssub.s32 %s22, %s34
      %s36 = ssub.s32 %s23, %s30
      %s37 = sor.u32 %s35, %s36
      %p38 = scmp.eq.s32.totalorder %s37, 0
      %s40 = sadd.s32 %s39, 1
      %s41 = scalar_select %p38, %s39, %s40
      %p44 = pneg %p38
      %p45 = scmp.eq.s32.totalorder %s15, 1
      %p46 = por %p44, %p45
      %p47 = scmp.ne.s32.totalorder %s39, %s42
      %p48 = scmp.eq.s32.totalorder %s15, 0
      %p49 = por %p47, %p48
      %p50 = scmp.ne.s32.totalorder %s39, %s42
      %p51 = scmp.eq.s32.totalorder %s20, 1
      %p52 = por %p50, %p51
      %p53 = scmp.ne.s32.totalorder %s42, %s43
      %p54 = scmp.eq.s32.totalorder %s20, 0
      %p55 = por %p53, %p54
      %p56 = scmp.ne.s32.totalorder %s42, %s43
      %p57 = scmp.eq.s32.totalorder %s21, 1
      %p58 = por %p56, %p57
      %p60 = scmp.ne.s32.totalorder %s43, %s59
      %p61 = scmp.eq.s32.totalorder %s21, 0
      %p62 = por %p60, %p61
      %s64 = sadd.s32 %s63, 1
      %p67 = scmp.eq.s32.totalorder %s15, 1
      %p68 = scmp.ne.s32.totalorder %s63, %s65
      %p69 = scmp.eq.s32.totalorder %s15, 0
      %p70 = por %p68, %p69
      %p71 = scmp.ne.s32.totalorder %s63, %s65
      %p72 = scmp.eq.s32.totalorder %s20, 1
      %p73 = por %p71, %p72
      %p74 = scmp.ne.s32.totalorder %s65, %s66
      %p75 = scmp.eq.s32.totalorder %s20, 0
      %p76 = por %p74, %p75
      %p77 = scmp.ne.s32.totalorder %s65, %s66
      %p78 = scmp.eq.s32.totalorder %s21, 1
      %p79 = por %p77, %p78
      %p81 = scmp.ne.s32.totalorder %s66, %s80
      %p82 = scmp.eq.s32.totalorder %s21, 0
      %p83 = por %p81, %p82
      %s85 = sadd.s32 %s84, 1
      %p88 = scmp.eq.s32.totalorder %s15, 1
      %p89 = scmp.ne.s32.totalorder %s84, %s86
      %p90 = scmp.eq.s32.totalorder %s15, 0
      %p91 = por %p89, %p90
      %p92 = scmp.ne.s32.totalorder %s84, %s86
      %p93 = scmp.eq.s32.totalorder %s20, 1
      %p94 = por %p92, %p93
      %p95 = scmp.ne.s32.totalorder %s86, %s87
      %p96 = scmp.eq.s32.totalorder %s20, 0
      %p97 = por %p95, %p96
      %p98 = scmp.ne.s32.totalorder %s86, %s87
      %p99 = scmp.eq.s32.totalorder %s21, 1
      %p100 = por %p98, %p99
      %p102 = scmp.ne.s32.totalorder %s87, %s101
      %p103 = scmp.eq.s32.totalorder %s21, 0
      %p104 = por %p102, %p103
      %s105 = ssub.s32 %s22, %s34
      %s106 = ssub.s32 %s23, %s30
      %s107 = sor.u32 %s105, %s106
      %p108 = scmp.eq.s32.totalorder %s107, 0
      %s110 = sadd.s32 %s109, 1
      %s111 = scalar_select %p108, %s109, %s110
      %p114 = pneg %p108
      %p115 = scmp.eq.s32.totalorder %s15, 1
      %p116 = por %p114, %p115
      %p117 = scmp.ne.s32.totalorder %s109, %s112
      %p118 = scmp.eq.s32.totalorder %s15, 0
      %p119 = por %p117, %p118
      %p120 = scmp.ne.s32.totalorder %s109, %s112
      %p121 = scmp.eq.s32.totalorder %s20, 1
      %p122 = por %p120, %p121
      %p123 = scmp.ne.s32.totalorder %s112, %s113
      %p124 = scmp.eq.s32.totalorder %s20, 0
      %p125 = por %p123, %p124
      %p126 = scmp.ne.s32.totalorder %s112, %s113
      %p127 = scmp.eq.s32.totalorder %s21, 1
      %p128 = por %p126, %p127
      %p130 = scmp.ne.s32.totalorder %s113, %s129
      %p131 = scmp.eq.s32.totalorder %s21, 0
      %p132 = por %p130, %p131
      %p133 = scmp.le.s32.totalorder 1, %s15
      %p134 = scmp.lt.s32.totalorder %s15, 3
      %p135 = pnand %p133, %p134
      %p136 = pneg %p135
      // Predicated region
      $region9: #{tpu_custom_call.1} parent=5 // pred_check
        _
      $region10: #{tpu_custom_call.1} parent=5 // pred_check_branch
        %138 = sbr.rel (%p135) target = $region12
      $region11: #{tpu_custom_call.1} parent=5 // pred_region
        %s139 = ssub.s32 %s15, 1
        // Predicated region
        $region13: #{tpu_custom_call.1} parent=11 // pred_check
          %p140 = pneg %p76
        $region14: #{tpu_custom_call.1} parent=11 // pred_check_branch
          %142 = sbr.rel (%p140) target = $region16
        $region15: #{tpu_custom_call.1} parent=11 // pred_region
          _
        $region16: #{tpu_custom_call.1} parent=11 // pred_fallthru
          _
        // Predicated region
        $region17: #{tpu_custom_call.1} parent=11 // pred_check
          %p143 = pneg %p97
        $region18: #{tpu_custom_call.1} parent=11 // pred_check_branch
          %145 = sbr.rel (%p143) target = $region20
        $region19: #{tpu_custom_call.1} parent=11 // pred_region
          _
        $region20: #{tpu_custom_call.1} parent=11 // pred_fallthru
          _
      $region12: #{tpu_custom_call.1} parent=5 // pred_fallthru
        _
      %p146 = scmp.lt.s32.totalorder %s15, 2
      // Predicated region
      $region21: #{tpu_custom_call.1} parent=5 // pred_check
        %p147 = pneg %p146
      $region22: #{tpu_custom_call.1} parent=5 // pred_check_branch
        %149 = sbr.rel (%p147) target = $region24
      $region23: #{tpu_custom_call.1} parent=5 // pred_region
        // Predicated region
        $region25: #{tpu_custom_call.1} parent=23 // pred_check
          %p150 = pneg %p49
        $region26: #{tpu_custom_call.1} parent=23 // pred_check_branch
          %152 = sbr.rel (%p150) target = $region28
        $region27: #{tpu_custom_call.1} parent=23 // pred_region
          %s153 = sand.u32 %s39, 1
          %s154 = scalar_lea.sflag [#allocation3], %s153
          %s155 = sand.u32 %s39, 1
          %s156 = smul.addr %s155, 48
          %s157 = scalar_lea.vmem [#allocation2], %s156
          %s158 = smul.u32 2, %s23
          %160 = vsyncadd %s154, 0
          %s161 = smul.addr %s22, 12
          %s162 = sadd.s32 %s158, %s161
          %s163 = smul.addr %s162, 4
          %s164 = scalar_lea.hbm %s0, %s163
          %s165 = sshll.u32 %s164, 4
          %s166 = int_to_ptr.hbm [resolvable:$true] %s165
          %s167 = sshll.u32 %s157, 4
          %s168 = int_to_ptr.vmem [resolvable:$true] %s167
          %173 = dma.hbm_to_vmem [thread:$0]  %s166, 768, %s168, %s154, 128, 128, 8
        $region28: #{tpu_custom_call.1} parent=23 // pred_fallthru
          _
      $region24: #{tpu_custom_call.1} parent=5 // pred_fallthru
        _
      %p174 = scmp.le.s32.totalorder 1, %s15
      %p175 = scmp.lt.s32.totalorder %s15, 3
      %p176 = pnand %p174, %p175
      %p177 = pneg %p176
      // Predicated region
      $region29: #{tpu_custom_call.1} parent=5 // pred_check
        _
      $region30: #{tpu_custom_call.1} parent=5 // pred_check_branch
        %179 = sbr.rel (%p176) target = $region32
      $region31: #{tpu_custom_call.1} parent=5 // pred_region
        %s180 = ssub.s32 %s15, 1
        %s181 = sand.u32 %s42, 1
        %s182 = scalar_lea.sflag [#allocation3], %s181
        %s183 = sand.u32 %s42, 1
        %s184 = smul.addr %s183, 48
        %s185 = scalar_lea.vmem [#allocation2], %s184
        // Predicated region
        $region33: #{tpu_custom_call.1} parent=31 // pred_check
          %p186 = pneg %p55
        $region34: #{tpu_custom_call.1} parent=31 // pred_check_branch
          %188 = sbr.rel (%p186) target = $region36
        $region35: #{tpu_custom_call.1} parent=31 // pred_region
          %190 = dma.done %s182, 768
        $region36: #{tpu_custom_call.1} parent=31 // pred_fallthru
          _
        %s191 = sand.u32 %s42, 1
        %s192 = scalar_lea.sflag [#allocation3], %s191
        %s193 = sand.u32 %s42, 1
        %s194 = smul.addr %s193, 48
        %s195 = scalar_lea.vmem [#allocation2], %s194
        %p196 = pneg %p55
        %p197 = pneg %p52
        %p198 = pneg %p76
        %p199 = pneg %p73
        %p200 = pneg %p97
        %p201 = pneg %p94
        %p202 = pneg %p125
        %p203 = pneg %p122
        %s204 = sand.u32 %s112, 1
        %s205 = scalar_lea.sflag [#allocation4], %s204
        %s206 = sand.u32 %s112, 1
        %s207 = smul.addr %s206, 16
        %s208 = scalar_lea.vmem [#allocation5], %s207
        %s209 = smul.u32 2, %s25
        %s210 = smul.u32 2, %s25
        %v212 = vld [vmem:[%s1] sm:$0xf]
        %v213 = vld [vmem:[%s185] sm:$0xff]
        %v214 = vld [vmem:[%s185 + $0x8] sm:$0xff]
        %v215 = vld [vmem:[%s185 + $0x10] sm:$0xff]
        %v216 = vld [vmem:[%s185 + $0x18] sm:$0xff]
        %v217 = vld [vmem:[%s185 + $0x20] sm:$0xff]
        %v218 = vld [vmem:[%s185 + $0x28] sm:$0xff]
        %v219 = vld [vmem:[%s2] sm:$0xff]
        %221 = vset.pattern.permute.xlu0 0
        %222 = vperm.xlu0 %221, %v219
        %v223 = vpop.permute.xlu0 %222
        %v231 = vunpack.c.l.b16 %v213
        %v232 = vunpack.c.h.b16 %v213
        %v233 = vunpack.c.l.b16 %v214
        %v234 = vunpack.c.h.b16 %v214
        %v235 = vunpack.c.l.b16 %v215
        %v236 = vunpack.c.h.b16 %v215
        %v237 = vunpack.c.l.b16 %v216
        %v238 = vunpack.c.h.b16 %v216
        %v239 = vunpack.c.l.b16 %v217
        %v240 = vunpack.c.h.b16 %v217
        %v241 = vunpack.c.l.b16 %v218
        %v242 = vunpack.c.h.b16 %v218
        %v243 = vpack.c.b16 %v233, %v231
        %v244 = vpack.c.b16 %v234, %v232
        %v245 = vpack.c.b16 %v237, %v235
        %v246 = vpack.c.b16 %v238, %v236
        %v247 = vpack.c.b16 %v241, %v239
        %v248 = vpack.c.b16 %v242, %v240
        %vm255 = vcmask 392192
        %v257 = vsel %vm255, %v212, 0
        %259 = vmatpush.bf16.msra.mxu0 0
        %260 = vmatpush.bf16.msra.mxu0 0
        %261 = vmatpush.bf16.msra.mxu0 0
        %262 = vmatpush.bf16.msra.mxu0 0
        %263 = vmatpush.bf16.msra.mxu0 0
        %264 = vmatpush.bf16.msra.mxu0 %v247
        %265 = vmatpush.bf16.msra.mxu0 %v245
        %266 = vmatpush.bf16.msra.mxu0 %v243
        %267 = vmatmul.bf16.gmra.mxu0 %v257
        %v268 = vpop.f32.mrf.mxu0
        %v269 = vadd.f32 %v223, %v268
        %v270 = vpop.f32.mrf.mxu0
        %271 = vdwg.mxu0
        %272 = vmatpush.bf16.msra.mxu0 0
        %273 = vmatpush.bf16.msra.mxu0 0
        %274 = vmatpush.bf16.msra.mxu0 0
        %275 = vmatpush.bf16.msra.mxu0 0
        %276 = vmatpush.bf16.msra.mxu0 0
        %277 = vmatpush.bf16.msra.mxu0 %v248
        %278 = vmatpush.bf16.msra.mxu0 %v246
        %279 = vmatpush.bf16.msra.mxu0 %v244
        %280 = vmatmul.bf16.gmra.mxu0 %v257
        %v281 = vpop.f32.mrf.mxu0
        %v282 = vadd.f32 %v223, %v281
        %v283 = vpop.f32.mrf.mxu0
        %284 = vdwg.mxu0
        %v285 = vmax.f32 %v269, 0.0
        %v286 = vmax.f32 %v282, 0.0
        %287 = vst [vmem:[%s208] sm:$0xff] %v285
        %288 = vst [vmem:[%s208 + $0x8] sm:$0xff] %v286
        %s289 = sand.u32 %s112, 1
        %s290 = scalar_lea.sflag [#allocation4], %s289
        %s291 = sand.u32 %s112, 1
        %s292 = smul.addr %s291, 16
        %s293 = scalar_lea.vmem [#allocation5], %s292
        // Predicated region
        $region37: #{tpu_custom_call.1} parent=31 // pred_check
          %p294 = pneg %p122
        $region38: #{tpu_custom_call.1} parent=31 // pred_check_branch
          %296 = sbr.rel (%p294) target = $region40
        $region39: #{tpu_custom_call.1} parent=31 // pred_region
          %s297 = smul.u32 2, %s25
          %299 = vsyncadd %s290, 0
          %s300 = smul.addr %s24, 2
          %s301 = sadd.s32 %s297, %s300
          %s302 = smul.addr %s301, 8
          %s303 = scalar_lea.hbm %s3, %s302
          %s305 = sshll.u32 %s293, 4
          %s306 = int_to_ptr.vmem [resolvable:$true] %s305
          %s307 = sshll.u32 %s303, 4
          %s308 = int_to_ptr.hbm [resolvable:$true] %s307
          %310 = dma.vmem_to_hbm [thread:$0]  %s306, 256, %s308, %s290
        $region40: #{tpu_custom_call.1} parent=31 // pred_fallthru
          _
      $region32: #{tpu_custom_call.1} parent=5 // pred_fallthru
        _
      %p311 = scmp.le.s32.totalorder 2, %s15
      // Predicated region
      $region41: #{tpu_custom_call.1} parent=5 // pred_check
        %p312 = pneg %p311
      $region42: #{tpu_custom_call.1} parent=5 // pred_check_branch
        %314 = sbr.rel (%p312) target = $region44
      $region43: #{tpu_custom_call.1} parent=5 // pred_region
        %s315 = ssub.s32 %s15, 2
        // Predicated region
        $region45: #{tpu_custom_call.1} parent=43 // pred_check
          %p316 = pneg %p128
        $region46: #{tpu_custom_call.1} parent=43 // pred_check_branch
          %318 = sbr.rel (%p316) target = $region48
        $region47: #{tpu_custom_call.1} parent=43 // pred_region
          %s319 = sand.u32 %s113, 1
          %s320 = scalar_lea.sflag [#allocation4], %s319
          %s321 = sand.u32 %s113, 1
          %s322 = smul.addr %s321, 16
          %s323 = scalar_lea.vmem [#allocation5], %s322
          %325 = dma.done %s320, 256
        $region48: #{tpu_custom_call.1} parent=43 // pred_fallthru
          _
      $region44: #{tpu_custom_call.1} parent=5 // pred_fallthru
        _
    $region6: #{tpu_custom_call.1} parent=1 // loop_footer
      %s19 = sadd.s32 1, %s15
    $region7: #{tpu_custom_call.1} parent=1 // loop_footer_branch
      %14 = sbr.rel target = $region3
    $region8: #{tpu_custom_call.1} parent=1 // loop_exit
      _
    %326 = vsyncpa [#allocation3], 1
    %s327 = scalar_lea.sflag [#allocation3], 1
    %328 = vsyncpa %s327, 1
    %329 = vsyncpa [#allocation4], 1
    %s330 = scalar_lea.sflag [#allocation4], 1
    %331 = vsyncpa %s330, 1

</llo_original>
